<compile_context>
chip_gen: v6e
topology: v6e:2x2x1
jax: 0.10.0
libtpu: 0.0.40
codegen_flags: <defaults>
</compile_context>

<pallas_src>
import functools

import jax
import jax.numpy as jnp
from jax.experimental import pallas as pl
from jax.experimental.pallas import tpu as pltpu


def _round_up(x, k):
    return (x + k - 1) // k * k


# ----------------------------- kernel -------------------------------------- #

def vdphi_kernel(x_ref, o_ref, *, m):
    """vdPHI forward for one row tile.

    x_ref: [TM, D]    input rows (feature 0 = the variable that gets rooted)
    o_ref: [TM, LPAD] lane-dense padded output tile (LPAD = round_up(m*D+1, 128))
    """
    x = x_ref[...].astype(jnp.float32)                 # [TM, D]
    tm, d = x.shape

    x0 = x[:, 0:1]                                     # [TM, 1]

    # signed m-th root of column 0:  |x0|**(1/m) * sign(x0)
    ax = jnp.abs(x0)
    root = jnp.exp(jnp.log(ax) * jnp.float32(1.0 / m))     # EUP exp/log
    root = jnp.where(ax == 0.0, jnp.float32(0.0), root)    # 0 ** (1/m) = 0
    sgn = jnp.where(x0 > 0.0, jnp.float32(1.0),
                    jnp.where(x0 < 0.0, jnp.float32(-1.0), jnp.float32(0.0)))
    x0r = sgn * root                                   # [TM, 1]

    # base = x with column 0 replaced by 1.0  (== cat([ones, x[:,1:]], dim=1))
    col = jax.lax.broadcasted_iota(jnp.int32, (tm, d), 1)
    base = jnp.where(col == 0, jnp.float32(1.0), x)    # [TM, D]

    # Zero the whole lane-dense tile once (covers the padded tail lanes),
    # then write the m blocks of width D and the final x0'^m column.
    o_ref[...] = jnp.zeros_like(o_ref)
    p = jnp.ones((tm, 1), jnp.float32)
    for i in range(m):                                 # m is small & static
        o_ref[:, i * d:(i + 1) * d] = base * p         # x0'^i * [1, x[:,1:]]
        p = p * x0r
    o_ref[:, m * d:m * d + 1] = p                      # x0'^m


# ----------------------------- wrapper -------------------------------------- #

def vdphi_forward(x, m, *, row_tile=256):
    """vdPHI.forward(x) for x of shape [N, D]; returns [N, m*D + 1]."""
    n, d = x.shape
    out_dim = m * d + 1
    lpad = _round_up(out_dim, 128)                     # lane-dense output slab

    # Row tiling: sublane-aligned, capped so tiles stay small in VMEM.
    tm = min(row_tile, _round_up(n, 8))
    npad = _round_up(n, tm)
    xp = jnp.pad(x, ((0, npad - n), (0, 0))) if npad != n else x

    out_padded = pl.pallas_call(
        functools.partial(vdphi_kernel, m=m),
        out_shape=jax.ShapeDtypeStruct((npad, lpad), jnp.float32),
        grid_spec=pltpu.PrefetchScalarGridSpec(
            num_scalar_prefetch=0,
            grid=(npad // tm,),
            in_specs=[pl.BlockSpec((tm, d), lambda i: (i, 0))],
            out_specs=pl.BlockSpec((tm, lpad), lambda i: (i, 0)),
        ),
        compiler_params=pltpu.CompilerParams(
            dimension_semantics=("parallel",)),
    )(xp)

    return out_padded[:n, :out_dim]


# ----------------------------- reference ------------------------------------ #

def vdphi_reference(x, m):
    """Pure-JAX mirror of the PyTorch vdPHI.forward (for validation)."""
    x0 = jnp.abs(x[:, 0:1]) ** (1.0 / m) * jnp.sign(x[:, 0:1])
    xr = jnp.concatenate([x0, x[:, 1:]], axis=1)
    y = [jnp.ones((x.shape[0], 1), x.dtype), xr[:, 1:]]
    for i in range(1, m + 1):
        y.append(xr[:, 0:1] ** i)
        if i < m:
            y.append(xr[:, 0:1] ** i * xr[:, 1:])
    return jnp.concatenate(y, axis=1)


# ----------------------------- main ----------------------------------------- #

if __name__ == "__main__":
    m = 3          # vdPHI(m=3)
    n, d = 8, 4    # small batch of 8 rows, 4 input features

    key = jax.random.PRNGKey(0)
    x = jax.random.normal(key, (n, d), jnp.float32)

    out = vdphi_forward(x, m)
    jax.block_until_ready(out)

    ref = vdphi_reference(x, m)
    assert out.shape == (n, m * d + 1), out.shape
    max_err = float(jnp.max(jnp.abs(out - ref)))
    assert jnp.allclose(out, ref, atol=1e-5, rtol=1e-5), max_err

    print("KERNEL_OK")
</pallas_src>

<mosaic_0001>
module attributes {stable_mosaic.version = 11 : i64} {
  func.func @vdphi_kernel(%arg0: i32, %arg1: memref<8x4xf32, #tpu.memory_space<vmem>>, %arg2: memref<8x128xf32, #tpu.memory_space<vmem>>) attributes {dimension_semantics = [#tpu.dimension_semantics<parallel>], iteration_bounds = array<i64: 1>, scalar_prefetch = 0 : i64, scratch_operands = 0 : i64, tpu.core_type = #tpu.core_type<tc>, window_params = [{transform_indices = @transform_0, window_bounds = array<i64: 8, 4>}, {transform_indices = @transform_1, window_bounds = array<i64: 8, 128>}]} {
    %c0 = arith.constant 0 : index
    %c0_0 = arith.constant 0 : index
    %0 = vector.load %arg1[%c0, %c0_0] : memref<8x4xf32, #tpu.memory_space<vmem>>, vector<8x4xf32>
    %1 = vector.extract_strided_slice %0 {offsets = [0, 0], sizes = [8, 1], strides = [1, 1]} : vector<8x4xf32> to vector<8x1xf32>
    %2 = math.absf %1 : vector<8x1xf32>
    %3 = math.log %2 : vector<8x1xf32>
    %cst = arith.constant 0.333333343 : f32
    %4 = vector.broadcast %cst : f32 to vector<8x1xf32>
    %5 = arith.mulf %3, %4 : vector<8x1xf32>
    %6 = math.exp %5 : vector<8x1xf32>
    %cst_1 = arith.constant 0.000000e+00 : f32
    %7 = vector.broadcast %cst_1 : f32 to vector<8x1xf32>
    %8 = arith.cmpf oeq, %2, %7 : vector<8x1xf32>
    %cst_2 = arith.constant 0.000000e+00 : f32
    %9 = vector.broadcast %cst_2 : f32 to vector<8x1xf32>
    %10 = arith.select %8, %9, %6 : vector<8x1xi1>, vector<8x1xf32>
    %cst_3 = arith.constant 0.000000e+00 : f32
    %11 = vector.broadcast %cst_3 : f32 to vector<8x1xf32>
    %12 = arith.cmpf ogt, %1, %11 : vector<8x1xf32>
    %cst_4 = arith.constant 0.000000e+00 : f32
    %13 = vector.broadcast %cst_4 : f32 to vector<8x1xf32>
    %14 = arith.cmpf olt, %1, %13 : vector<8x1xf32>
    %cst_5 = arith.constant -1.000000e+00 : f32
    %cst_6 = arith.constant 0.000000e+00 : f32
    %15 = vector.broadcast %cst_5 : f32 to vector<8x1xf32>
    %16 = vector.broadcast %cst_6 : f32 to vector<8x1xf32>
    %17 = arith.select %14, %15, %16 : vector<8x1xi1>, vector<8x1xf32>
    %cst_7 = arith.constant 1.000000e+00 : f32
    %18 = vector.broadcast %cst_7 : f32 to vector<8x1xf32>
    %19 = arith.select %12, %18, %17 : vector<8x1xi1>, vector<8x1xf32>
    %20 = arith.mulf %19, %10 : vector<8x1xf32>
    %21 = tpu.iota {dimensions = array<i32: 1>} : vector<8x4xi32>
    %c0_i32 = arith.constant 0 : i32
    %22 = vector.broadcast %c0_i32 : i32 to vector<8x4xi32>
    %23 = arith.cmpi eq, %21, %22 : vector<8x4xi32>
    %cst_8 = arith.constant 1.000000e+00 : f32
    %24 = vector.broadcast %cst_8 : f32 to vector<8x4xf32>
    %25 = arith.select %23, %24, %0 : vector<8x4xi1>, vector<8x4xf32>
    %cst_9 = arith.constant 0.000000e+00 : f32
    %26 = vector.broadcast %cst_9 : f32 to vector<8x128xf32>
    %c0_10 = arith.constant 0 : index
    %c0_11 = arith.constant 0 : index
    %27 = vector.load %arg2[%c0_10, %c0_11] : memref<8x128xf32, #tpu.memory_space<vmem>>, vector<8x128xf32>
    tpu.vector_store %arg2[%c0_10, %c0_11], %26 {strides = array<i32>} : memref<8x128xf32, #tpu.memory_space<vmem>>, vector<8x128xf32>,
    %cst_12 = arith.constant 1.000000e+00 : f32
    %28 = vector.broadcast %cst_12 : f32 to vector<8x1xf32>
    %29 = vector.broadcast %28 : vector<8x1xf32> to vector<8x4xf32>
    %30 = arith.mulf %25, %29 : vector<8x4xf32>
    %c0_13 = arith.constant 0 : index
    %c0_14 = arith.constant 0 : index
    %31 = vector.load %arg2[%c0_13, %c0_14] : memref<8x128xf32, #tpu.memory_space<vmem>>, vector<8x4xf32>
    tpu.vector_store %arg2[%c0_13, %c0_14], %30 {strides = array<i32>} : memref<8x128xf32, #tpu.memory_space<vmem>>, vector<8x4xf32>,
    %32 = arith.mulf %28, %20 : vector<8x1xf32>
    %33 = vector.broadcast %32 : vector<8x1xf32> to vector<8x4xf32>
    %34 = arith.mulf %25, %33 : vector<8x4xf32>
    %c0_15 = arith.constant 0 : index
    %c4 = arith.constant 4 : index
    %35 = vector.load %arg2[%c0_15, %c4] : memref<8x128xf32, #tpu.memory_space<vmem>>, vector<8x4xf32>
    tpu.vector_store %arg2[%c0_15, %c4], %34 {strides = array<i32>} : memref<8x128xf32, #tpu.memory_space<vmem>>, vector<8x4xf32>,
    %36 = arith.mulf %32, %20 : vector<8x1xf32>
    %37 = vector.broadcast %36 : vector<8x1xf32> to vector<8x4xf32>
    %38 = arith.mulf %25, %37 : vector<8x4xf32>
    %c0_16 = arith.constant 0 : index
    %c8 = arith.constant 8 : index
    %39 = vector.load %arg2[%c0_16, %c8] : memref<8x128xf32, #tpu.memory_space<vmem>>, vector<8x4xf32>
    tpu.vector_store %arg2[%c0_16, %c8], %38 {strides = array<i32>} : memref<8x128xf32, #tpu.memory_space<vmem>>, vector<8x4xf32>,
    %40 = arith.mulf %36, %20 : vector<8x1xf32>
    %c0_17 = arith.constant 0 : index
    %c12 = arith.constant 12 : index
    %41 = vector.load %arg2[%c0_17, %c12] : memref<8x128xf32, #tpu.memory_space<vmem>>, vector<8x1xf32>
    tpu.vector_store %arg2[%c0_17, %c12], %40 {strides = array<i32>} : memref<8x128xf32, #tpu.memory_space<vmem>>, vector<8x1xf32>,
    return
  }
  func.func @transform_0(%arg0: i32) -> (i32, i32) {
    %c0_i32 = arith.constant 0 : i32
    %c0_i32_0 = arith.constant 0 : i32
    return %arg0, %c0_i32 : i32, i32
  }
  func.func @transform_1(%arg0: i32) -> (i32, i32) {
    %c0_i32 = arith.constant 0 : i32
    %c0_i32_0 = arith.constant 0 : i32
    return %arg0, %c0_i32 : i32, i32
  }
}

</mosaic_0001>

<llo_original>
// kernel: tpu_custom_call.1
$region0: #{tpu_custom_call.1}
  #allocation0 [shape = 'u32[]', space=smem, size = 0x4, offset = 0x4, fixed_abs, tag = 'smem constant byte address 0x4 - core index']
  #allocation1 [shape = 'u32[144,128]{1,0:T(1,128)}', space=vmem, size = 0x12000, scoped, tag = 'internal scratch']
  %s0 = inlined_call_operand.vmem [shape: f32[8,4], index: 0, kind: input, shape index: {}]
  %s1 = inlined_call_operand.hbm [shape: f32[8,128], index: 1, kind: output, shape index: {}]
  %s2 = sld [smem:[#allocation0]]
  $region14: #{tpu_custom_call.1} parent=0
    _
  %s4 = ssub.s32 1, %s2
  %s5 = scalar_select 0, %s4, %s2
  $region1: #{tpu_custom_call.1} parent=0
    #allocation2 [shape = 'u8[4096]{0}', space=vmem, size = 0x1000, scoped, tag = 'output window, operand 0, single buffered']
    #allocation3 [shape = 's32[1]{0}', space=sflag, size = 0x4, scoped, tag = 'scoped memory for tpu_custom_call.1']
    %6 = vsyncpa [#allocation3], 0
    // Predicated region
    $region2: #{tpu_custom_call.1} parent=1 // pred_check
      _
    $region3: #{tpu_custom_call.1} parent=1 // pred_check_branch
      %8 = sbr.rel (0) target = $region5
    $region4: #{tpu_custom_call.1} parent=1 // pred_region
      _
    $region5: #{tpu_custom_call.1} parent=1 // pred_fallthru
      _
    %v9 = vld [vmem:[%s0] sm:$0xff]
    %v10 = vand.u32 2147483647, %v9
    %v11 = vlog2.pop %v10
    %v12 = vmul.f32 %v11, 0.6931472
    %v13 = vmul.f32 %v12, 0.33333334
    %v14 = vmul.f32 %v13, 1.442695
    %v15 = vpow.pop %v14
    %vm16 = vcmp.eq.f32.partialorder %v10, 0.0
    %v17 = vsel %vm16, 0.0, %v15
    %vm18 = vcmp.gt.f32.partialorder %v9, 0.0
    %vm19 = vcmp.lt.f32.partialorder %v9, 0.0
    %v20 = vsel %vm19, -1.0, 0.0
    %v21 = vsel %vm18, 1.0, %v20
    %v22 = vmul.f32 %v21, %v17
    %v23 = vlaneseq
    %v24 = vand.u32 %v23, 127
    %vm25 = vcmp.eq.s32.totalorder %v24, 0
    %v26 = vsel %vm25, 1.0, %v9
    %27 = vst [vmem:[#allocation2] sm:$0xff] 0.0
    %vm28 = vcmask 31744
    %29 = vst.msk [vmem:[#allocation2] sm:$0xff] %vm28, %v26
    %31 = vset.pattern.permute.xlu0 0
    %32 = vperm.xlu0 %31, %v22
    %v33 = vpop.permute.xlu0 %32
    %v35 = vmul.f32 %v26, %v33
    %37 = vrot.lane.b32.xlu0 %v35, 4
    %v38 = vpop.permute.xlu0 %37
    %vm40 = vcmask 64544
    %41 = vst.msk [vmem:[#allocation2] sm:$0xff] %vm40, %v38
    %v42 = vmul.f32 %v22, %v22
    %44 = vset.pattern.permute.xlu0 0
    %45 = vperm.xlu0 %44, %v42
    %v46 = vpop.permute.xlu0 %45
    %v48 = vmul.f32 %v26, %v46
    %50 = vrot.lane.b32.xlu0 %v48, 8
    %v51 = vpop.permute.xlu0 %50
    %vm53 = vcmask 97344
    %54 = vst.msk [vmem:[#allocation2] sm:$0xff] %vm53, %v51
    %v55 = vmul.f32 %v42, %v22
    %57 = vrot.lane.b32.xlu0 %v55, 12
    %v58 = vpop.permute.xlu0 %57
    %vm60 = vcmask 105568
    %61 = vst.msk [vmem:[#allocation2] sm:$0xff] %vm60, %v58
    // Predicated region
    $region6: #{tpu_custom_call.1} parent=1 // pred_check
      _
    $region7: #{tpu_custom_call.1} parent=1 // pred_check_branch
      %63 = sbr.rel (0) target = $region9
    $region8: #{tpu_custom_call.1} parent=1 // pred_region
      %s65 = ssub.s32 128, 128
      %66 = vsyncadd [#allocation3], %s65
      %s68 = sshll.u32 [#allocation2], 4
      %s69 = int_to_ptr.vmem [resolvable:$true] %s68
      %71 = dma.vmem_to_hbm [thread:$0]  %s69, 128, %s1, [#allocation3]
    $region9: #{tpu_custom_call.1} parent=1 // pred_fallthru
      _
    // Predicated region
    $region10: #{tpu_custom_call.1} parent=1 // pred_check
      _
    $region11: #{tpu_custom_call.1} parent=1 // pred_check_branch
      %73 = sbr.rel (0) target = $region13
    $region12: #{tpu_custom_call.1} parent=1 // pred_region
      %74 = dma.done [#allocation3], 128
    $region13: #{tpu_custom_call.1} parent=1 // pred_fallthru
      _
    %75 = vsyncpa [#allocation3], 1

</llo_original>
